<compile_context>
chip_gen: v6e
topology: v6e:2x2x1
jax: 0.10.0
libtpu: 0.0.40
codegen_flags: <defaults>
</compile_context>

<pallas_src>
import jax
import jax.numpy as jnp
from jax import lax
from jax.experimental import pallas as pl
from jax.experimental.pallas import tpu as pltpu


_H = 7          # hidden width
_LANE = 128     # lanes per vreg row
_SUB = 8        # sublanes per vreg

# Packed-parameter layout in the (32,) f32 SMEM slab:
#   [ 0: 7)  w1[0, :]   (Linear(2,7).weight.T row 0)
#   [ 7:14)  w1[1, :]   (Linear(2,7).weight.T row 1)
#   [14:21)  b1
#   [21:28)  w2[:, 0]   (Linear(7,1).weight.T)
#   [28]     b2
#   [29:32)  zero padding


def pack_params(w1, b1, w2, b2):
    """Pack all 29 parameter scalars into one (32,) f32 slab. Call ONCE."""
    return jnp.concatenate([
        w1[0, :].astype(jnp.float32),
        w1[1, :].astype(jnp.float32),
        b1.reshape(-1).astype(jnp.float32),
        w2.reshape(-1).astype(jnp.float32),
        b2.reshape(-1).astype(jnp.float32),
        jnp.zeros((3,), jnp.float32),
    ])


def mlp_kernel(params_ref, x_ref, o_ref):
    # params_ref: (32,) f32 in SMEM (scalar prefetch, loaded once for the grid).
    # x_ref:      (2, TBS, 128) f32 in VMEM — feature-major, batch sublane/lane dense.
    # o_ref:      (TBS, 128) f32 in VMEM.
    #
    # Hoisted scalar reads: done once per grid step, reused by every chunk.
    w10 = [params_ref[j] for j in range(_H)]
    w11 = [params_ref[_H + j] for j in range(_H)]
    b1 = [params_ref[2 * _H + j] for j in range(_H)]
    w2 = [params_ref[3 * _H + j] for j in range(_H)]
    b2 = params_ref[4 * _H]

    tbs = x_ref.shape[1]                       # static block sublane count
    chunk = 32 if tbs % 32 == 0 else tbs       # 8..32 rows per inner chunk
    n_chunks = tbs // chunk

    def body(c, carry):
        r = pl.multiple_of(c * chunk, chunk)
        x0 = x_ref[0, pl.ds(r, chunk), :]      # (chunk, 128)
        x1 = x_ref[1, pl.ds(r, chunk), :]      # (chunk, 128)
        acc = None
        # Fully unrolled VPU math: K=2 contraction (hidden) + K=7 (output).
        for j in range(_H):
            h = jnp.maximum(x0 * w10[j] + x1 * w11[j] + b1[j], 0.0)   # ReLU, VPU
            t = h * w2[j]
            acc = t if acc is None else acc + t
        y = acc + b2
        z = jnp.exp(-y)                        # EUP transcendental slot
        o_ref[pl.ds(r, chunk), :] = 1.0 / (1.0 + z)   # exact sigmoid (1e-5 tol)
        return carry

    lax.fori_loop(0, n_chunks, body, 0, unroll=True)


def _round_up(n, m):
    return ((n + m - 1) // m) * m


def _choose_tbs(rows):
    # Block sublane-rows per grid step. 256 rows -> 256 KiB input + 128 KiB
    # output per block; with double buffering well under v7x's scoped VMEM.
    for t in (8, 32, 64, 128, 256):
        if rows <= t:
            return t
    return 256


def forward_feature_major(x_fm, params, *, tbs=None):
    """Fast path. x_fm: (2, Sp, 128) f32, feature-major, Sp a multiple of 8.
    Returns (Sp, 128) f32 sigmoid(MLP(x))."""
    _, sp, lanes = x_fm.shape
    assert lanes == _LANE and sp % _SUB == 0
    if tbs is None:
        tbs = _choose_tbs(sp)
    assert sp % tbs == 0
    n_elems = sp * _LANE

    grid_spec = pltpu.PrefetchScalarGridSpec(
        num_scalar_prefetch=1,                       # params -> SMEM, once
        grid=(sp // tbs,),
        in_specs=[pl.BlockSpec((2, tbs, _LANE), lambda i, p: (0, i, 0))],
        out_specs=pl.BlockSpec((tbs, _LANE), lambda i, p: (i, 0)),
    )
    return pl.pallas_call(
        mlp_kernel,
        out_shape=jax.ShapeDtypeStruct((sp, _LANE), jnp.float32),
        grid_spec=grid_spec,
        compiler_params=pltpu.CompilerParams(
            dimension_semantics=("parallel",)),      # shard batch across TCs
        cost_estimate=pl.CostEstimate(
            flops=50 * n_elems,
            transcendentals=n_elems,
            bytes_accessed=(3 * n_elems + 32) * 4,
        ),
    )(params, x_fm)


def net_forward(x, params):
    """PyTorch-convention entry. x: (B, 2) f32 -> (B, 1) f32.
    (For large B, prefer forward_feature_major to skip the transpose/pad.)"""
    B = x.shape[0]
    rows = -(-B // _LANE)
    tbs = _choose_tbs(_round_up(rows, _SUB))
    Bp = _round_up(B, tbs * _LANE)

    xp = jnp.pad(x.astype(jnp.float32), ((0, Bp - B), (0, 0)))
    x_fm = xp.T.reshape(2, Bp // _LANE, _LANE)       # feature-major, lane-dense
    out_fm = forward_feature_major(x_fm, params, tbs=tbs)
    return out_fm.reshape(Bp, 1)[:B]


if __name__ == "__main__":
    key = jax.random.PRNGKey(0)
    kx, k1, k2, k3, k4 = jax.random.split(key, 5)

    x = jax.random.normal(kx, (8, 2), jnp.float32)   # batch=8, features=2
    # Stored as (in, out): w1 = Linear(2,7).weight.T, w2 = Linear(7,1).weight.T
    w1 = jax.random.uniform(k1, (2, 7), jnp.float32, -0.5, 0.5)
    b1 = jax.random.uniform(k2, (7,), jnp.float32, -0.5, 0.5)
    w2 = jax.random.uniform(k3, (7, 1), jnp.float32, -0.5, 0.5)
    b2 = jax.random.uniform(k4, (1,), jnp.float32, -0.5, 0.5)

    params = pack_params(w1, b1, w2, b2)             # packed once, reused

    out = net_forward(x, params)
    jax.block_until_ready(out)

    # Pure-JAX reference (same math as the PyTorch module).
    ref = jax.nn.sigmoid(jnp.maximum(x @ w1 + b1, 0.0) @ w2 + b2)
    assert out.shape == (8, 1)
    assert jnp.allclose(out, ref, atol=1e-5, rtol=1e-5)
    print("KERNEL_OK")
</pallas_src>

<mosaic_0001>
module attributes {stable_mosaic.version = 11 : i64} {
  func.func @mlp_kernel(%arg0: i32, %arg1: memref<32xf32, #tpu.memory_space<smem>>, %arg2: memref<2x8x128xf32, #tpu.memory_space<vmem>>, %arg3: memref<8x128xf32, #tpu.memory_space<vmem>>) attributes {dimension_semantics = [#tpu.dimension_semantics<parallel>], iteration_bounds = array<i64: 1>, scalar_prefetch = 1 : i64, scratch_operands = 0 : i64, tpu.core_type = #tpu.core_type<tc>, window_params = [{transform_indices = @transform_0, window_bounds = array<i64: 2, 8, 128>}, {transform_indices = @transform_1, window_bounds = array<i64: 8, 128>}]} {
    %c0 = arith.constant 0 : index
    %0 = memref.load %arg1[%c0] : memref<32xf32, #tpu.memory_space<smem>>
    %c1 = arith.constant 1 : index
    %1 = memref.load %arg1[%c1] : memref<32xf32, #tpu.memory_space<smem>>
    %c2 = arith.constant 2 : index
    %2 = memref.load %arg1[%c2] : memref<32xf32, #tpu.memory_space<smem>>
    %c3 = arith.constant 3 : index
    %3 = memref.load %arg1[%c3] : memref<32xf32, #tpu.memory_space<smem>>
    %c4 = arith.constant 4 : index
    %4 = memref.load %arg1[%c4] : memref<32xf32, #tpu.memory_space<smem>>
    %c5 = arith.constant 5 : index
    %5 = memref.load %arg1[%c5] : memref<32xf32, #tpu.memory_space<smem>>
    %c6 = arith.constant 6 : index
    %6 = memref.load %arg1[%c6] : memref<32xf32, #tpu.memory_space<smem>>
    %c7 = arith.constant 7 : index
    %7 = memref.load %arg1[%c7] : memref<32xf32, #tpu.memory_space<smem>>
    %c8 = arith.constant 8 : index
    %8 = memref.load %arg1[%c8] : memref<32xf32, #tpu.memory_space<smem>>
    %c9 = arith.constant 9 : index
    %9 = memref.load %arg1[%c9] : memref<32xf32, #tpu.memory_space<smem>>
    %c10 = arith.constant 10 : index
    %10 = memref.load %arg1[%c10] : memref<32xf32, #tpu.memory_space<smem>>
    %c11 = arith.constant 11 : index
    %11 = memref.load %arg1[%c11] : memref<32xf32, #tpu.memory_space<smem>>
    %c12 = arith.constant 12 : index
    %12 = memref.load %arg1[%c12] : memref<32xf32, #tpu.memory_space<smem>>
    %c13 = arith.constant 13 : index
    %13 = memref.load %arg1[%c13] : memref<32xf32, #tpu.memory_space<smem>>
    %c14 = arith.constant 14 : index
    %14 = memref.load %arg1[%c14] : memref<32xf32, #tpu.memory_space<smem>>
    %c15 = arith.constant 15 : index
    %15 = memref.load %arg1[%c15] : memref<32xf32, #tpu.memory_space<smem>>
    %c16 = arith.constant 16 : index
    %16 = memref.load %arg1[%c16] : memref<32xf32, #tpu.memory_space<smem>>
    %c17 = arith.constant 17 : index
    %17 = memref.load %arg1[%c17] : memref<32xf32, #tpu.memory_space<smem>>
    %c18 = arith.constant 18 : index
    %18 = memref.load %arg1[%c18] : memref<32xf32, #tpu.memory_space<smem>>
    %c19 = arith.constant 19 : index
    %19 = memref.load %arg1[%c19] : memref<32xf32, #tpu.memory_space<smem>>
    %c20 = arith.constant 20 : index
    %20 = memref.load %arg1[%c20] : memref<32xf32, #tpu.memory_space<smem>>
    %c21 = arith.constant 21 : index
    %21 = memref.load %arg1[%c21] : memref<32xf32, #tpu.memory_space<smem>>
    %c22 = arith.constant 22 : index
    %22 = memref.load %arg1[%c22] : memref<32xf32, #tpu.memory_space<smem>>
    %c23 = arith.constant 23 : index
    %23 = memref.load %arg1[%c23] : memref<32xf32, #tpu.memory_space<smem>>
    %c24 = arith.constant 24 : index
    %24 = memref.load %arg1[%c24] : memref<32xf32, #tpu.memory_space<smem>>
    %c25 = arith.constant 25 : index
    %25 = memref.load %arg1[%c25] : memref<32xf32, #tpu.memory_space<smem>>
    %c26 = arith.constant 26 : index
    %26 = memref.load %arg1[%c26] : memref<32xf32, #tpu.memory_space<smem>>
    %c27 = arith.constant 27 : index
    %27 = memref.load %arg1[%c27] : memref<32xf32, #tpu.memory_space<smem>>
    %c28 = arith.constant 28 : index
    %28 = memref.load %arg1[%c28] : memref<32xf32, #tpu.memory_space<smem>>
    %c0_i32 = arith.constant 0 : i32
    %c8_i32 = arith.constant 8 : i32
    %29 = arith.muli %c0_i32, %c8_i32 : i32
    %30 = tpu.assume_multiple %29, 8 : i32
    %c0_0 = arith.constant 0 : index
    %31 = arith.index_cast %30 : i32 to index
    %c0_1 = arith.constant 0 : index
    %32 = vector.load %arg2[%c0_0, %31, %c0_1] : memref<2x8x128xf32, #tpu.memory_space<vmem>>, vector<1x8x128xf32>
    %33 = vector.shape_cast %32 : vector<1x8x128xf32> to vector<8x128xf32>
    %c1_2 = arith.constant 1 : index
    %34 = arith.index_cast %30 : i32 to index
    %c0_3 = arith.constant 0 : index
    %35 = vector.load %arg2[%c1_2, %34, %c0_3] : memref<2x8x128xf32, #tpu.memory_space<vmem>>, vector<1x8x128xf32>
    %36 = vector.shape_cast %35 : vector<1x8x128xf32> to vector<8x128xf32>
    %37 = vector.broadcast %0 : f32 to vector<8x128xf32>
    %38 = arith.mulf %33, %37 : vector<8x128xf32>
    %39 = vector.broadcast %7 : f32 to vector<8x128xf32>
    %40 = arith.mulf %36, %39 : vector<8x128xf32>
    %41 = arith.addf %38, %40 : vector<8x128xf32>
    %42 = vector.broadcast %14 : f32 to vector<8x128xf32>
    %43 = arith.addf %41, %42 : vector<8x128xf32>
    %cst = arith.constant 0.000000e+00 : f32
    %44 = vector.broadcast %cst : f32 to vector<8x128xf32>
    %45 = arith.maximumf %43, %44 : vector<8x128xf32>
    %46 = vector.broadcast %21 : f32 to vector<8x128xf32>
    %47 = arith.mulf %45, %46 : vector<8x128xf32>
    %48 = vector.broadcast %1 : f32 to vector<8x128xf32>
    %49 = arith.mulf %33, %48 : vector<8x128xf32>
    %50 = vector.broadcast %8 : f32 to vector<8x128xf32>
    %51 = arith.mulf %36, %50 : vector<8x128xf32>
    %52 = arith.addf %49, %51 : vector<8x128xf32>
    %53 = vector.broadcast %15 : f32 to vector<8x128xf32>
    %54 = arith.addf %52, %53 : vector<8x128xf32>
    %cst_4 = arith.constant 0.000000e+00 : f32
    %55 = vector.broadcast %cst_4 : f32 to vector<8x128xf32>
    %56 = arith.maximumf %54, %55 : vector<8x128xf32>
    %57 = vector.broadcast %22 : f32 to vector<8x128xf32>
    %58 = arith.mulf %56, %57 : vector<8x128xf32>
    %59 = arith.addf %47, %58 : vector<8x128xf32>
    %60 = vector.broadcast %2 : f32 to vector<8x128xf32>
    %61 = arith.mulf %33, %60 : vector<8x128xf32>
    %62 = vector.broadcast %9 : f32 to vector<8x128xf32>
    %63 = arith.mulf %36, %62 : vector<8x128xf32>
    %64 = arith.addf %61, %63 : vector<8x128xf32>
    %65 = vector.broadcast %16 : f32 to vector<8x128xf32>
    %66 = arith.addf %64, %65 : vector<8x128xf32>
    %cst_5 = arith.constant 0.000000e+00 : f32
    %67 = vector.broadcast %cst_5 : f32 to vector<8x128xf32>
    %68 = arith.maximumf %66, %67 : vector<8x128xf32>
    %69 = vector.broadcast %23 : f32 to vector<8x128xf32>
    %70 = arith.mulf %68, %69 : vector<8x128xf32>
    %71 = arith.addf %59, %70 : vector<8x128xf32>
    %72 = vector.broadcast %3 : f32 to vector<8x128xf32>
    %73 = arith.mulf %33, %72 : vector<8x128xf32>
    %74 = vector.broadcast %10 : f32 to vector<8x128xf32>
    %75 = arith.mulf %36, %74 : vector<8x128xf32>
    %76 = arith.addf %73, %75 : vector<8x128xf32>
    %77 = vector.broadcast %17 : f32 to vector<8x128xf32>
    %78 = arith.addf %76, %77 : vector<8x128xf32>
    %cst_6 = arith.constant 0.000000e+00 : f32
    %79 = vector.broadcast %cst_6 : f32 to vector<8x128xf32>
    %80 = arith.maximumf %78, %79 : vector<8x128xf32>
    %81 = vector.broadcast %24 : f32 to vector<8x128xf32>
    %82 = arith.mulf %80, %81 : vector<8x128xf32>
    %83 = arith.addf %71, %82 : vector<8x128xf32>
    %84 = vector.broadcast %4 : f32 to vector<8x128xf32>
    %85 = arith.mulf %33, %84 : vector<8x128xf32>
    %86 = vector.broadcast %11 : f32 to vector<8x128xf32>
    %87 = arith.mulf %36, %86 : vector<8x128xf32>
    %88 = arith.addf %85, %87 : vector<8x128xf32>
    %89 = vector.broadcast %18 : f32 to vector<8x128xf32>
    %90 = arith.addf %88, %89 : vector<8x128xf32>
    %cst_7 = arith.constant 0.000000e+00 : f32
    %91 = vector.broadcast %cst_7 : f32 to vector<8x128xf32>
    %92 = arith.maximumf %90, %91 : vector<8x128xf32>
    %93 = vector.broadcast %25 : f32 to vector<8x128xf32>
    %94 = arith.mulf %92, %93 : vector<8x128xf32>
    %95 = arith.addf %83, %94 : vector<8x128xf32>
    %96 = vector.broadcast %5 : f32 to vector<8x128xf32>
    %97 = arith.mulf %33, %96 : vector<8x128xf32>
    %98 = vector.broadcast %12 : f32 to vector<8x128xf32>
    %99 = arith.mulf %36, %98 : vector<8x128xf32>
    %100 = arith.addf %97, %99 : vector<8x128xf32>
    %101 = vector.broadcast %19 : f32 to vector<8x128xf32>
    %102 = arith.addf %100, %101 : vector<8x128xf32>
    %cst_8 = arith.constant 0.000000e+00 : f32
    %103 = vector.broadcast %cst_8 : f32 to vector<8x128xf32>
    %104 = arith.maximumf %102, %103 : vector<8x128xf32>
    %105 = vector.broadcast %26 : f32 to vector<8x128xf32>
    %106 = arith.mulf %104, %105 : vector<8x128xf32>
    %107 = arith.addf %95, %106 : vector<8x128xf32>
    %108 = vector.broadcast %6 : f32 to vector<8x128xf32>
    %109 = arith.mulf %33, %108 : vector<8x128xf32>
    %110 = vector.broadcast %13 : f32 to vector<8x128xf32>
    %111 = arith.mulf %36, %110 : vector<8x128xf32>
    %112 = arith.addf %109, %111 : vector<8x128xf32>
    %113 = vector.broadcast %20 : f32 to vector<8x128xf32>
    %114 = arith.addf %112, %113 : vector<8x128xf32>
    %cst_9 = arith.constant 0.000000e+00 : f32
    %115 = vector.broadcast %cst_9 : f32 to vector<8x128xf32>
    %116 = arith.maximumf %114, %115 : vector<8x128xf32>
    %117 = vector.broadcast %27 : f32 to vector<8x128xf32>
    %118 = arith.mulf %116, %117 : vector<8x128xf32>
    %119 = arith.addf %107, %118 : vector<8x128xf32>
    %120 = vector.broadcast %28 : f32 to vector<8x128xf32>
    %121 = arith.addf %119, %120 : vector<8x128xf32>
    %cst_10 = arith.constant 0.000000e+00 : f32
    %122 = vector.broadcast %cst_10 : f32 to vector<8x128xf32>
    %123 = arith.subf %122, %121 : vector<8x128xf32>
    %124 = math.exp %123 : vector<8x128xf32>
    %cst_11 = arith.constant 1.000000e+00 : f32
    %125 = vector.broadcast %cst_11 : f32 to vector<8x128xf32>
    %126 = arith.addf %125, %124 : vector<8x128xf32>
    %cst_12 = arith.constant 1.000000e+00 : f32
    %127 = vector.broadcast %cst_12 : f32 to vector<8x128xf32>
    %128 = arith.divf %127, %126 : vector<8x128xf32>
    %129 = arith.index_cast %30 : i32 to index
    %c0_13 = arith.constant 0 : index
    %130 = vector.load %arg3[%129, %c0_13] : memref<8x128xf32, #tpu.memory_space<vmem>>, vector<8x128xf32>
    tpu.vector_store %arg3[%129, %c0_13], %128 {strides = array<i32>} : memref<8x128xf32, #tpu.memory_space<vmem>>, vector<8x128xf32>,
    %c1_i32 = arith.constant 1 : i32
    return
  }
  func.func @transform_0(%arg0: i32, %arg1: memref<32xf32, #tpu.memory_space<smem>>) -> (i32, i32, i32) {
    %c0_i32 = arith.constant 0 : i32
    %c0_i32_0 = arith.constant 0 : i32
    %c0_i32_1 = arith.constant 0 : i32
    return %c0_i32, %arg0, %c0_i32_0 : i32, i32, i32
  }
  func.func @transform_1(%arg0: i32, %arg1: memref<32xf32, #tpu.memory_space<smem>>) -> (i32, i32) {
    %c0_i32 = arith.constant 0 : i32
    %c0_i32_0 = arith.constant 0 : i32
    return %arg0, %c0_i32 : i32, i32
  }
}

</mosaic_0001>

<llo_original>
// kernel: tpu_custom_call.1
$region0: #{tpu_custom_call.1}
  #allocation0 [shape = 'u32[]', space=smem, size = 0x4, offset = 0x4, fixed_abs, tag = 'smem constant byte address 0x4 - core index']
  #allocation1 [shape = 'u32[144,128]{1,0:T(1,128)}', space=vmem, size = 0x12000, scoped, tag = 'internal scratch']
  #allocation2 [shape = 's32[1]{0}', space=sflag, size = 0x4, scoped, tag = 'scoped memory for tpu_custom_call.1']
  #allocation3 [shape = 'u8[512]{0}', space=smem, size = 0x200, scoped, tag = 'prefetched SMEM operand 0']
  %s0 = inlined_call_operand.hbm [shape: f32[32], index: 0, kind: input, shape index: {}]
  %s1 = inlined_call_operand.hbm [shape: f32[2,8,128], index: 1, kind: input, shape index: {}]
  %s2 = inlined_call_operand.hbm [shape: f32[8,128], index: 2, kind: output, shape index: {}]
  %s3 = sld [smem:[#allocation0]]
  $region18: #{tpu_custom_call.1} parent=0
    _
  %s5 = ssub.s32 1, %s3
  %s6 = scalar_select 0, %s5, %s3
  %8 = dma.hbm_to_smem %s0, 16, [#allocation3], [#allocation2]
  %9 = dma.done [#allocation2], 16
  %10 = sfence
  $region1: #{tpu_custom_call.1} parent=0
    #allocation4 [shape = 'u8[8192]{0}', space=vmem, size = 0x2000, scoped, tag = 'input window, operand 1, single buffered']
    #allocation5 [shape = 's32[1]{0}', space=sflag, size = 0x4, scoped, tag = 'scoped memory for tpu_custom_call.1']
    #allocation6 [shape = 's32[1]{0}', space=sflag, size = 0x4, scoped, tag = 'scoped memory for tpu_custom_call.1']
    #allocation7 [shape = 'u8[4096]{0}', space=vmem, size = 0x1000, scoped, tag = 'output window, operand 0, single buffered']
    %11 = vsyncpa [#allocation5], 0
    %12 = vsyncpa [#allocation6], 0
    // Predicated region
    $region2: #{tpu_custom_call.1} parent=1 // pred_check
      _
    $region3: #{tpu_custom_call.1} parent=1 // pred_check_branch
      %14 = sbr.rel (0) target = $region5
    $region4: #{tpu_custom_call.1} parent=1 // pred_region
      %s16 = ssub.s32 256, 256
      %17 = vsyncadd [#allocation5], %s16
      %s18 = sshll.u32 [#allocation4], 4
      %s19 = int_to_ptr.vmem [resolvable:$true] %s18
      %24 = dma.hbm_to_vmem [thread:$0]  %s1, 256, %s19, [#allocation5], 128, 128, 8
    $region5: #{tpu_custom_call.1} parent=1 // pred_fallthru
      _
    // Predicated region
    $region6: #{tpu_custom_call.1} parent=1 // pred_check
      _
    $region7: #{tpu_custom_call.1} parent=1 // pred_check_branch
      %26 = sbr.rel (0) target = $region9
    $region8: #{tpu_custom_call.1} parent=1 // pred_region
      %27 = dma.done [#allocation5], 256
    $region9: #{tpu_custom_call.1} parent=1 // pred_fallthru
      _
    %s28 = sld [smem:[#allocation3]]
    %s29 = sld [smem:[#allocation3 + $0x1]]
    %s30 = sld [smem:[#allocation3 + $0x2]]
    %s31 = sld [smem:[#allocation3 + $0x3]]
    %s32 = sld [smem:[#allocation3 + $0x4]]
    %s33 = sld [smem:[#allocation3 + $0x5]]
    %s34 = sld [smem:[#allocation3 + $0x6]]
    %s35 = sld [smem:[#allocation3 + $0x7]]
    %s36 = sld [smem:[#allocation3 + $0x8]]
    %s37 = sld [smem:[#allocation3 + $0x9]]
    %s38 = sld [smem:[#allocation3 + $0xa]]
    %s39 = sld [smem:[#allocation3 + $0xb]]
    %s40 = sld [smem:[#allocation3 + $0xc]]
    %s41 = sld [smem:[#allocation3 + $0xd]]
    %s42 = sld [smem:[#allocation3 + $0xe]]
    %s43 = sld [smem:[#allocation3 + $0xf]]
    %s44 = sld [smem:[#allocation3 + $0x10]]
    %s45 = sld [smem:[#allocation3 + $0x11]]
    %s46 = sld [smem:[#allocation3 + $0x12]]
    %s47 = sld [smem:[#allocation3 + $0x13]]
    %s48 = sld [smem:[#allocation3 + $0x14]]
    %s49 = sld [smem:[#allocation3 + $0x15]]
    %s50 = sld [smem:[#allocation3 + $0x16]]
    %s51 = sld [smem:[#allocation3 + $0x17]]
    %s52 = sld [smem:[#allocation3 + $0x18]]
    %s53 = sld [smem:[#allocation3 + $0x19]]
    %s54 = sld [smem:[#allocation3 + $0x1a]]
    %s55 = sld [smem:[#allocation3 + $0x1b]]
    %s56 = sld [smem:[#allocation3 + $0x1c]]
    %v57 = vld [vmem:[#allocation4] sm:$0xff]
    %s58 = sadd.s32 0, 8
    %s59 = scalar_lea.vmem [#allocation4], %s58
    %v60 = vld [vmem:[%s59] sm:$0xff]
    %v61 = vstv %s28
    %v62 = vmul.f32 %v57, %v61
    %v63 = vstv %s35
    %v64 = vmul.f32 %v60, %v63
    %v65 = vadd.f32 %v62, %v64
    %v66 = vstv %s42
    %v67 = vadd.f32 %v65, %v66
    %v68 = vmax.f32 %v67, 0.0
    %v69 = vstv %s49
    %v70 = vmul.f32 %v68, %v69
    %v71 = vstv %s29
    %v72 = vmul.f32 %v57, %v71
    %v73 = vstv %s36
    %v74 = vmul.f32 %v60, %v73
    %v75 = vadd.f32 %v72, %v74
    %v76 = vstv %s43
    %v77 = vadd.f32 %v75, %v76
    %v78 = vmax.f32 %v77, 0.0
    %v79 = vstv %s50
    %v80 = vmul.f32 %v78, %v79
    %v81 = vadd.f32 %v70, %v80
    %v82 = vstv %s30
    %v83 = vmul.f32 %v57, %v82
    %v84 = vstv %s37
    %v85 = vmul.f32 %v60, %v84
    %v86 = vadd.f32 %v83, %v85
    %v87 = vstv %s44
    %v88 = vadd.f32 %v86, %v87
    %v89 = vmax.f32 %v88, 0.0
    %v90 = vstv %s51
    %v91 = vmul.f32 %v89, %v90
    %v92 = vadd.f32 %v81, %v91
    %v93 = vstv %s31
    %v94 = vmul.f32 %v57, %v93
    %v95 = vstv %s38
    %v96 = vmul.f32 %v60, %v95
    %v97 = vadd.f32 %v94, %v96
    %v98 = vstv %s45
    %v99 = vadd.f32 %v97, %v98
    %v100 = vmax.f32 %v99, 0.0
    %v101 = vstv %s52
    %v102 = vmul.f32 %v100, %v101
    %v103 = vadd.f32 %v92, %v102
    %v104 = vstv %s32
    %v105 = vmul.f32 %v57, %v104
    %v106 = vstv %s39
    %v107 = vmul.f32 %v60, %v106
    %v108 = vadd.f32 %v105, %v107
    %v109 = vstv %s46
    %v110 = vadd.f32 %v108, %v109
    %v111 = vmax.f32 %v110, 0.0
    %v112 = vstv %s53
    %v113 = vmul.f32 %v111, %v112
    %v114 = vadd.f32 %v103, %v113
    %v115 = vstv %s33
    %v116 = vmul.f32 %v57, %v115
    %v117 = vstv %s40
    %v118 = vmul.f32 %v60, %v117
    %v119 = vadd.f32 %v116, %v118
    %v120 = vstv %s47
    %v121 = vadd.f32 %v119, %v120
    %v122 = vmax.f32 %v121, 0.0
    %v123 = vstv %s54
    %v124 = vmul.f32 %v122, %v123
    %v125 = vadd.f32 %v114, %v124
    %v126 = vstv %s34
    %v127 = vmul.f32 %v57, %v126
    %v128 = vstv %s41
    %v129 = vmul.f32 %v60, %v128
    %v130 = vadd.f32 %v127, %v129
    %v131 = vstv %s48
    %v132 = vadd.f32 %v130, %v131
    %v133 = vmax.f32 %v132, 0.0
    %v134 = vstv %s55
    %v135 = vmul.f32 %v133, %v134
    %v136 = vadd.f32 %v125, %v135
    %v137 = vstv %s56
    %v138 = vadd.f32 %v136, %v137
    %v139 = vsub.f32 0.0, %v138
    %v140 = vmul.f32 %v139, 1.442695
    %v141 = vpow.pop %v140
    %v142 = vadd.f32 %v141, 1.0
    %v143 = vrcp.pop %v142
    %v144 = vmul.f32 1.0, %v143
    %145 = vst [vmem:[#allocation7] sm:$0xff] %v144
    // Predicated region
    $region10: #{tpu_custom_call.1} parent=1 // pred_check
      _
    $region11: #{tpu_custom_call.1} parent=1 // pred_check_branch
      %147 = sbr.rel (0) target = $region13
    $region12: #{tpu_custom_call.1} parent=1 // pred_region
      %s149 = ssub.s32 128, 128
      %150 = vsyncadd [#allocation6], %s149
      %s152 = sshll.u32 [#allocation7], 4
      %s153 = int_to_ptr.vmem [resolvable:$true] %s152
      %155 = dma.vmem_to_hbm [thread:$0]  %s153, 128, %s2, [#allocation6]
    $region13: #{tpu_custom_call.1} parent=1 // pred_fallthru
      _
    // Predicated region
    $region14: #{tpu_custom_call.1} parent=1 // pred_check
      _
    $region15: #{tpu_custom_call.1} parent=1 // pred_check_branch
      %157 = sbr.rel (0) target = $region17
    $region16: #{tpu_custom_call.1} parent=1 // pred_region
      %158 = dma.done [#allocation6], 128
    $region17: #{tpu_custom_call.1} parent=1 // pred_fallthru
      _
    %159 = vsyncpa [#allocation5], 1
    %160 = vsyncpa [#allocation6], 1

</llo_original>
